<compile_context>
chip_gen: v7x
topology: tpu7x:2x2x1
jax: 0.10.0
libtpu: 0.0.40
codegen_flags: <defaults>
</compile_context>

<pallas_src>
import functools

import jax
import jax.numpy as jnp
from jax.experimental import pallas as pl
from jax.experimental.pallas import tpu as pltpu

_LANE = 128


def _round_up(x, m):
    return ((x + m - 1) // m) * m


def _ensemble_mlp_kernel(x_ref, w1_ref, b1_ref, w2_ref, b2_ref, w3_ref, b3_ref,
                         o_ref):
    # One (block_b, *) batch tile for one ensemble member, fully VMEM-resident.
    in_dim = x_ref.shape[-1]
    out_dim = o_ref.shape[-1]

    x = x_ref[...]                                   # (block_b, in_dim) f32
    w1 = w1_ref[...]                                 # (in_dim, n_hid)   f32

    if in_dim <= 8:
        # Tiny contraction (K=in_dim): broadcast multiply-adds on the VPU
        # instead of burning an MXU pass at <2% utilization.  Do NOT raise
        # this threshold: each k costs 2 VALU ops over a (bb, n_hid) slab
        # (no f32 FMA on v5e/v6e) -- above ~8 features the MXU pass wins.
        h1 = x[:, 0:1] * w1[0:1, :]
        for k in range(1, in_dim):
            h1 = h1 + x[:, k:k + 1] * w1[k:k + 1, :]
        h1 = h1 + b1_ref[...]
    else:
        h1 = jnp.dot(x.astype(w1.dtype), w1,
                     preferred_element_type=jnp.float32) + b1_ref[...]
    h1 = jnp.maximum(h1, 0.0)

    # fc2: the real (n_hid x n_hid) matmul -> MXU.  Cast activations to the
    # weight dtype (bf16 fast path) so the MXU gets native operands; f32 acc.
    w2 = w2_ref[...]
    h2 = jnp.dot(h1.astype(w2.dtype), w2,
                 preferred_element_type=jnp.float32) + b2_ref[...]
    h2 = jnp.maximum(h2, 0.0)

    # fc3: weight columns are pre-padded to a 128-lane multiple (clean MXU N
    # block, padding is free) but only the real out_dim columns are written
    # back -- the HBM output stays narrow.
    w3 = w3_ref[...]
    out = jnp.dot(h2.astype(w3.dtype), w3,
                  preferred_element_type=jnp.float32)     # (bb, n_pad) f32
    o_ref[...] = (out[:, :out_dim] + b3_ref[...]).astype(o_ref.dtype)


def prepare_ensemble_params(params, compute_dtype=jnp.bfloat16):
    """One-time massaging of stacked params into kernel-ready form.

    params: w1 [E, in, hid], b1 [E, hid], w2 [E, hid, hid], b2 [E, hid],
            w3 [E, hid, out], b3 [E, out]
    Returns a dict with biases reshaped to (E, 1, n) rows, w3 zero-padded to a
    128-lane multiple, and fc2/fc3 weights cast to compute_dtype (bf16 by
    default: native MXU operand dtype, f32 accumulation in-kernel).
    Call once and reuse -- this keeps pad/reshape/cast ops off the forward path.
    """
    E, in_dim, n_hid = params["w1"].shape
    out_dim = params["w3"].shape[-1]
    n_pad = _round_up(out_dim, _LANE)

    w3 = params["w3"]
    if n_pad != out_dim:
        w3 = jnp.pad(w3, ((0, 0), (0, 0), (0, n_pad - out_dim)))

    return dict(
        # fc1 runs on the VPU against f32 activations -> keep f32.
        w1=params["w1"].astype(jnp.float32),
        b1=params["b1"].reshape(E, 1, n_hid).astype(jnp.float32),
        w2=params["w2"].astype(compute_dtype),
        b2=params["b2"].reshape(E, 1, n_hid).astype(jnp.float32),
        w3=w3.astype(compute_dtype),
        # b3 stays unpadded: it is added after the in-kernel slice to out_dim.
        b3=params["b3"].reshape(E, 1, out_dim).astype(jnp.float32),
    )


@functools.partial(jax.jit, static_argnames=("block_b",))
def ensemble_forward(x, prepared, block_b=512):
    """Run all E ensemble members in one fused pallas_call.

    x:        [B, input_dim] float32 (shared across members)
    prepared: output of prepare_ensemble_params (stacked, kernel-ready)
    returns   [E, B, output_dim]
    """
    B, in_dim = x.shape
    E, _, n_hid = prepared["w1"].shape
    n_pad = prepared["w3"].shape[-1]
    out_dim = prepared["b3"].shape[-1]

    # Batch tile: fill the MXU M dimension (default 512 rows), but never
    # exceed the sublane-rounded batch so small batches get a single tile.
    bb = min(block_b, _round_up(B, 8))
    nb = pl.cdiv(B, bb)                      # ragged last tile handled by Pallas

    # v7x has 2 TensorCores: if the whole (parallel, parallel) grid would be a
    # single step (E == 1 and B fits one tile), split the batch so both cores
    # get work.  Only possible when B > 8 (tile must stay 8-row aligned).
    if E * nb == 1 and B > 8:
        bb = _round_up(pl.cdiv(B, 2), 8)
        nb = pl.cdiv(B, bb)

    member = lambda e, i: (e, 0, 0)          # per-member resident block

    out = pl.pallas_call(
        _ensemble_mlp_kernel,
        out_shape=jax.ShapeDtypeStruct((E, B, out_dim), x.dtype),
        grid_spec=pltpu.PrefetchScalarGridSpec(
            num_scalar_prefetch=0,
            grid=(E, nb),                                    # E outer: weights stay resident
            in_specs=[
                pl.BlockSpec((bb, in_dim), lambda e, i: (i, 0)),   # x tile (shared)
                pl.BlockSpec((None, in_dim, n_hid), member),       # w1[e]
                pl.BlockSpec((None, 1, n_hid), member),            # b1[e]
                pl.BlockSpec((None, n_hid, n_hid), member),        # w2[e]
                pl.BlockSpec((None, 1, n_hid), member),            # b2[e]
                pl.BlockSpec((None, n_hid, n_pad), member),        # w3[e] (lane-padded)
                pl.BlockSpec((None, 1, out_dim), member),          # b3[e] (narrow)
            ],
            # Narrow (real out_dim) output block: full-dim last axis is legal;
            # HBM writeback is out_dim wide, not 128 wide.
            out_specs=pl.BlockSpec((None, bb, out_dim), lambda e, i: (e, i, 0)),
        ),
        compiler_params=pltpu.CompilerParams(
            dimension_semantics=("parallel", "parallel"),   # ensemble + batch tiles
        ),
    )(x, prepared["w1"], prepared["b1"], prepared["w2"], prepared["b2"],
      prepared["w3"], prepared["b3"])

    return out


def ensemble_model_forward(x, params, block_b=512, compute_dtype=jnp.bfloat16):
    """Single-member forward — exact semantics of EnsembleModel.forward.

    params: w1 [in, hid], b1 [hid], w2 [hid, hid], b2 [hid], w3 [hid, out], b3 [out]
    (For repeated calls, prepare_ensemble_params once and call ensemble_forward.)
    """
    stacked = {k: v[None] for k, v in params.items()}
    prepared = prepare_ensemble_params(stacked, compute_dtype=compute_dtype)
    return ensemble_forward(x, prepared, block_b=block_b)[0]


def init_ensemble_params(key, n_members, input_dim, output_dim, n_hid=128):
    """nn.Linear-style uniform init, stored as [E, in, out]."""
    ks = jax.random.split(key, 6)

    def linear(kw, kb, fan_in, fan_out):
        bound = 1.0 / float(fan_in) ** 0.5
        w = jax.random.uniform(kw, (n_members, fan_in, fan_out), jnp.float32,
                               -bound, bound)
        b = jax.random.uniform(kb, (n_members, fan_out), jnp.float32,
                               -bound, bound)
        return w, b

    w1, b1 = linear(ks[0], ks[1], input_dim, n_hid)
    w2, b2 = linear(ks[2], ks[3], n_hid, n_hid)
    w3, b3 = linear(ks[4], ks[5], n_hid, output_dim)
    return dict(w1=w1, b1=b1, w2=w2, b2=b2, w3=w3, b3=b3)


def reference_forward(x, w1, b1, w2, b2, w3, b3):
    h1 = jnp.maximum(x @ w1 + b1, 0.0)
    h2 = jnp.maximum(h1 @ w2 + b2, 0.0)
    return h2 @ w3 + b3


if __name__ == "__main__":
    key = jax.random.PRNGKey(0)
    k_x, k_p = jax.random.split(key)

    # two_moons-style: 2 input features, 2 output logits, hidden 128, E=4 members
    n_members, batch, input_dim, output_dim, n_hid = 4, 8, 2, 2, 128
    x = jax.random.normal(k_x, (batch, input_dim), dtype=jnp.float32)
    params = init_ensemble_params(k_p, n_members, input_dim, output_dim, n_hid)

    y_ref = jax.vmap(
        lambda w1, b1, w2, b2, w3, b3: reference_forward(x, w1, b1, w2, b2, w3, b3)
    )(params["w1"], params["b1"], params["w2"], params["b2"],
      params["w3"], params["b3"])

    # Exact f32 path (tight tolerance).
    prep_f32 = prepare_ensemble_params(params, compute_dtype=jnp.float32)
    y32 = jax.block_until_ready(ensemble_forward(x, prep_f32))
    assert y32.shape == (n_members, batch, output_dim)
    assert jnp.allclose(y32, y_ref, atol=1e-5, rtol=1e-5), "f32 ensemble mismatch"

    # bf16-MXU fast path (bf16 operands, f32 accumulation) -- loose tolerance.
    prep_bf16 = prepare_ensemble_params(params)   # default compute_dtype=bf16
    y16 = jax.block_until_ready(ensemble_forward(x, prep_bf16))
    assert y16.shape == (n_members, batch, output_dim)
    assert jnp.allclose(y16, y_ref, atol=5e-2, rtol=5e-2), "bf16 ensemble mismatch"

    # Single-member path == original EnsembleModel.forward (exact f32 check).
    single = {k: v[0] for k, v in params.items()}
    y0 = jax.block_until_ready(
        ensemble_model_forward(x, single, compute_dtype=jnp.float32))
    assert jnp.allclose(y0, y_ref[0], atol=1e-5, rtol=1e-5), "single-member mismatch"

    print("KERNEL_OK")
</pallas_src>

<mosaic_0001>
module attributes {stable_mosaic.version = 11 : i64} {
  func.func @_ensemble_mlp_kernel(%arg0: i32, %arg1: i32, %arg2: memref<8x2xf32, #tpu.memory_space<vmem>>, %arg3: memref<1x2x128xf32, #tpu.memory_space<vmem>>, %arg4: memref<1x1x128xf32, #tpu.memory_space<vmem>>, %arg5: memref<1x128x128xf32, #tpu.memory_space<vmem>>, %arg6: memref<1x1x128xf32, #tpu.memory_space<vmem>>, %arg7: memref<1x128x128xf32, #tpu.memory_space<vmem>>, %arg8: memref<1x1x2xf32, #tpu.memory_space<vmem>>, %arg9: memref<1x8x2xf32, #tpu.memory_space<vmem>>) attributes {dimension_semantics = [#tpu.dimension_semantics<parallel>, #tpu.dimension_semantics<parallel>], iteration_bounds = array<i64: 4, 1>, scalar_prefetch = 0 : i64, scratch_operands = 0 : i64, tpu.core_type = #tpu.core_type<tc>, window_params = [{transform_indices = @transform_0, window_bounds = array<i64: 8, 2>}, {transform_indices = @transform_1, window_bounds = array<i64: 1, 2, 128>}, {transform_indices = @transform_2, window_bounds = array<i64: 1, 1, 128>}, {transform_indices = @transform_3, window_bounds = array<i64: 1, 128, 128>}, {transform_indices = @transform_4, window_bounds = array<i64: 1, 1, 128>}, {transform_indices = @transform_5, window_bounds = array<i64: 1, 128, 128>}, {transform_indices = @transform_6, window_bounds = array<i64: 1, 1, 2>}, {transform_indices = @transform_7, window_bounds = array<i64: 1, 8, 2>}]} {
    %c0 = arith.constant 0 : index
    %c0_0 = arith.constant 0 : index
    %0 = vector.load %arg2[%c0, %c0_0] : memref<8x2xf32, #tpu.memory_space<vmem>>, vector<8x2xf32>
    %c0_1 = arith.constant 0 : index
    %c0_2 = arith.constant 0 : index
    %c0_3 = arith.constant 0 : index
    %1 = vector.load %arg3[%c0_1, %c0_2, %c0_3] : memref<1x2x128xf32, #tpu.memory_space<vmem>>, vector<1x2x128xf32>
    %2 = vector.shape_cast %1 : vector<1x2x128xf32> to vector<2x128xf32>
    %3 = vector.extract_strided_slice %0 {offsets = [0, 0], sizes = [8, 1], strides = [1, 1]} : vector<8x2xf32> to vector<8x1xf32>
    %4 = vector.extract_strided_slice %2 {offsets = [0, 0], sizes = [1, 128], strides = [1, 1]} : vector<2x128xf32> to vector<1x128xf32>
    %5 = vector.broadcast %3 : vector<8x1xf32> to vector<8x128xf32>
    %6 = vector.broadcast %4 : vector<1x128xf32> to vector<8x128xf32>
    %7 = arith.mulf %5, %6 : vector<8x128xf32>
    %8 = vector.extract_strided_slice %0 {offsets = [0, 1], sizes = [8, 1], strides = [1, 1]} : vector<8x2xf32> to vector<8x1xf32>
    %9 = vector.extract_strided_slice %2 {offsets = [1, 0], sizes = [1, 128], strides = [1, 1]} : vector<2x128xf32> to vector<1x128xf32>
    %10 = vector.broadcast %8 : vector<8x1xf32> to vector<8x128xf32>
    %11 = vector.broadcast %9 : vector<1x128xf32> to vector<8x128xf32>
    %12 = arith.mulf %10, %11 : vector<8x128xf32>
    %13 = arith.addf %7, %12 : vector<8x128xf32>
    %c0_4 = arith.constant 0 : index
    %c0_5 = arith.constant 0 : index
    %c0_6 = arith.constant 0 : index
    %14 = vector.load %arg4[%c0_4, %c0_5, %c0_6] : memref<1x1x128xf32, #tpu.memory_space<vmem>>, vector<1x1x128xf32>
    %15 = vector.shape_cast %14 : vector<1x1x128xf32> to vector<1x128xf32>
    %16 = vector.broadcast %15 : vector<1x128xf32> to vector<8x128xf32>
    %17 = arith.addf %13, %16 : vector<8x128xf32>
    %cst = arith.constant 0.000000e+00 : f32
    %18 = vector.broadcast %cst : f32 to vector<8x128xf32>
    %19 = arith.maximumf %17, %18 : vector<8x128xf32>
    %c0_7 = arith.constant 0 : index
    %c0_8 = arith.constant 0 : index
    %c0_9 = arith.constant 0 : index
    %20 = vector.load %arg5[%c0_7, %c0_8, %c0_9] : memref<1x128x128xf32, #tpu.memory_space<vmem>>, vector<1x128x128xf32>
    %21 = vector.shape_cast %20 : vector<1x128x128xf32> to vector<128x128xf32>
    %cst_10 = arith.constant dense<0.000000e+00> : vector<8x128xf32>
    %22 = tpu.matmul %19, %21, %cst_10 {dimension_numbers = #tpu.dot_dimension_numbers<[1], [0], [0], [1], [0, 0, 1, 1], [], []>} : vector<8x128xf32>, vector<128x128xf32>, vector<8x128xf32> -> vector<8x128xf32>
    %c0_11 = arith.constant 0 : index
    %c0_12 = arith.constant 0 : index
    %c0_13 = arith.constant 0 : index
    %23 = vector.load %arg6[%c0_11, %c0_12, %c0_13] : memref<1x1x128xf32, #tpu.memory_space<vmem>>, vector<1x1x128xf32>
    %24 = vector.shape_cast %23 : vector<1x1x128xf32> to vector<1x128xf32>
    %25 = vector.broadcast %24 : vector<1x128xf32> to vector<8x128xf32>
    %26 = arith.addf %22, %25 : vector<8x128xf32>
    %cst_14 = arith.constant 0.000000e+00 : f32
    %27 = vector.broadcast %cst_14 : f32 to vector<8x128xf32>
    %28 = arith.maximumf %26, %27 : vector<8x128xf32>
    %c0_15 = arith.constant 0 : index
    %c0_16 = arith.constant 0 : index
    %c0_17 = arith.constant 0 : index
    %29 = vector.load %arg7[%c0_15, %c0_16, %c0_17] : memref<1x128x128xf32, #tpu.memory_space<vmem>>, vector<1x128x128xf32>
    %30 = vector.shape_cast %29 : vector<1x128x128xf32> to vector<128x128xf32>
    %cst_18 = arith.constant dense<0.000000e+00> : vector<8x128xf32>
    %31 = tpu.matmul %28, %30, %cst_18 {dimension_numbers = #tpu.dot_dimension_numbers<[1], [0], [0], [1], [0, 0, 1, 1], [], []>} : vector<8x128xf32>, vector<128x128xf32>, vector<8x128xf32> -> vector<8x128xf32>
    %32 = vector.extract_strided_slice %31 {offsets = [0, 0], sizes = [8, 2], strides = [1, 1]} : vector<8x128xf32> to vector<8x2xf32>
    %c0_19 = arith.constant 0 : index
    %c0_20 = arith.constant 0 : index
    %c0_21 = arith.constant 0 : index
    %33 = vector.load %arg8[%c0_19, %c0_20, %c0_21] : memref<1x1x2xf32, #tpu.memory_space<vmem>>, vector<1x1x2xf32>
    %34 = vector.shape_cast %33 : vector<1x1x2xf32> to vector<1x2xf32>
    %35 = vector.broadcast %34 : vector<1x2xf32> to vector<8x2xf32>
    %36 = arith.addf %32, %35 : vector<8x2xf32>
    %c0_22 = arith.constant 0 : index
    %c0_23 = arith.constant 0 : index
    %c0_24 = arith.constant 0 : index
    %37 = vector.load %arg9[%c0_22, %c0_23, %c0_24] : memref<1x8x2xf32, #tpu.memory_space<vmem>>, vector<1x8x2xf32>
    %38 = vector.shape_cast %37 : vector<1x8x2xf32> to vector<8x2xf32>
    %39 = vector.shape_cast %36 : vector<8x2xf32> to vector<1x8x2xf32>
    tpu.vector_store %arg9[%c0_22, %c0_23, %c0_24], %39 {strides = array<i32>} : memref<1x8x2xf32, #tpu.memory_space<vmem>>, vector<1x8x2xf32>,
    return
  }
  func.func @transform_0(%arg0: i32, %arg1: i32) -> (i32, i32) {
    %c0_i32 = arith.constant 0 : i32
    %c0_i32_0 = arith.constant 0 : i32
    return %arg1, %c0_i32 : i32, i32
  }
  func.func @transform_1(%arg0: i32, %arg1: i32) -> (i32, i32, i32) {
    %c0_i32 = arith.constant 0 : i32
    %c0_i32_0 = arith.constant 0 : i32
    %c0_i32_1 = arith.constant 0 : i32
    return %arg0, %c0_i32, %c0_i32_0 : i32, i32, i32
  }
  func.func @transform_2(%arg0: i32, %arg1: i32) -> (i32, i32, i32) {
    %c0_i32 = arith.constant 0 : i32
    %c0_i32_0 = arith.constant 0 : i32
    %c0_i32_1 = arith.constant 0 : i32
    return %arg0, %c0_i32, %c0_i32_0 : i32, i32, i32
  }
  func.func @transform_3(%arg0: i32, %arg1: i32) -> (i32, i32, i32) {
    %c0_i32 = arith.constant 0 : i32
    %c0_i32_0 = arith.constant 0 : i32
    %c0_i32_1 = arith.constant 0 : i32
    return %arg0, %c0_i32, %c0_i32_0 : i32, i32, i32
  }
  func.func @transform_4(%arg0: i32, %arg1: i32) -> (i32, i32, i32) {
    %c0_i32 = arith.constant 0 : i32
    %c0_i32_0 = arith.constant 0 : i32
    %c0_i32_1 = arith.constant 0 : i32
    return %arg0, %c0_i32, %c0_i32_0 : i32, i32, i32
  }
  func.func @transform_5(%arg0: i32, %arg1: i32) -> (i32, i32, i32) {
    %c0_i32 = arith.constant 0 : i32
    %c0_i32_0 = arith.constant 0 : i32
    %c0_i32_1 = arith.constant 0 : i32
    return %arg0, %c0_i32, %c0_i32_0 : i32, i32, i32
  }
  func.func @transform_6(%arg0: i32, %arg1: i32) -> (i32, i32, i32) {
    %c0_i32 = arith.constant 0 : i32
    %c0_i32_0 = arith.constant 0 : i32
    %c0_i32_1 = arith.constant 0 : i32
    return %arg0, %c0_i32, %c0_i32_0 : i32, i32, i32
  }
  func.func @transform_7(%arg0: i32, %arg1: i32) -> (i32, i32, i32) {
    %c0_i32 = arith.constant 0 : i32
    %c0_i32_0 = arith.constant 0 : i32
    return %arg0, %arg1, %c0_i32 : i32, i32, i32
  }
}

</mosaic_0001>

<llo_original>
// kernel: ensemble_forward.1
$region0: #{ensemble_forward.1}
  #allocation0 [shape = 'u32[]', space=smem, size = 0x4, offset = 0x4, fixed_abs, tag = 'smem constant byte address 0x4 - core index']
  #allocation1 [shape = 'u32[144,128]{1,0:T(1,128)}', space=vmem, size = 0x12000, scoped, tag = 'internal scratch']
  %s0 = inlined_call_operand.vmem [shape: f32[8,2], index: 0, kind: input, shape index: {}]
  %s1 = inlined_call_operand.vmem [shape: f32[4,2,128], index: 1, kind: input, shape index: {}]
  %s2 = inlined_call_operand.vmem [shape: f32[4,1,128], index: 2, kind: input, shape index: {}]
  %s3 = inlined_call_operand.hbm [shape: f32[4,128,128], index: 3, kind: input, shape index: {}]
  %s4 = inlined_call_operand.vmem [shape: f32[4,1,128], index: 4, kind: input, shape index: {}]
  %s5 = inlined_call_operand.hbm [shape: f32[4,128,128], index: 5, kind: input, shape index: {}]
  %s6 = inlined_call_operand.vmem [shape: f32[4,1,2], index: 6, kind: input, shape index: {}]
  %s7 = inlined_call_operand.vmem [shape: f32[4,8,2], index: 7, kind: output, shape index: {}]
  %s8 = sld [smem:[#allocation0]]
  $region69: #{ensemble_forward.1} parent=0
    _
  %s10 = ssub.s32 1, %s8
  %s11 = scalar_select 0, %s10, %s8
  $region1: #{ensemble_forward.1} parent=0
    #allocation2 [shape = 'u8[131072]{0}', space=vmem, size = 0x20000, scoped, tag = 'input window, operand 3']
    #allocation3 [shape = 's32[2]{0}', space=sflag, size = 0x8, scoped, tag = 'scoped memory for ensemble_forward.1']
    #allocation4 [shape = 'u8[131072]{0}', space=vmem, size = 0x20000, scoped, tag = 'input window, operand 5']
    #allocation5 [shape = 's32[2]{0}', space=sflag, size = 0x8, scoped, tag = 'scoped memory for ensemble_forward.1']
    %12 = vsyncpa [#allocation3], 0
    %s13 = scalar_lea.sflag [#allocation3], 1
    %14 = vsyncpa %s13, 0
    %15 = vsyncpa [#allocation5], 0
    %s16 = scalar_lea.sflag [#allocation5], 1
    %17 = vsyncpa %s16, 0
    loop: start=0, step=1, limit=6
    $region2: #{ensemble_forward.1} parent=1 // loop_pre_header
      _
    $region3: #{ensemble_forward.1} parent=1 // loop_header
      %s19 = sphi 0, %s23
      %p20 = scmp.ge.s32.totalorder %s19, 6
      %s26 = sphi 0, %s38
      %s27 = sphi 0, %s34
      %s28 = sphi 0, %s26
      %s29 = sphi 0, %s27
      %s30 = sphi 0, %s28
      %s31 = sphi 0, %s29
      %s41 = sphi 0, %s43
      %s44 = sphi 0, %s41
      %s45 = sphi 0, %s44
      %s61 = sphi 0, %s45
      %s67 = sphi 0, %s69
      %s70 = sphi 0, %s67
      %s71 = sphi 0, %s70
      %s87 = sphi 0, %s71
      %s93 = sphi 0, %s95
      %s96 = sphi 0, %s93
      %s97 = sphi 0, %s96
      %s113 = sphi 0, %s97
      %s119 = sphi 0, %s121
      %s122 = sphi 0, %s119
      %s123 = sphi 0, %s122
      %s139 = sphi 0, %s123
      %s145 = sphi 0, %s147
      %s148 = sphi 0, %s145
      %s149 = sphi 0, %s148
      %s165 = sphi 0, %s149
      %s171 = sphi 0, %s173
      %s174 = sphi 0, %s171
      %s175 = sphi 0, %s174
      %s191 = sphi 0, %s175
      %s197 = sphi 0, %s199
      %s200 = sphi 0, %s197
      %s201 = sphi 0, %s200
      %s217 = sphi 0, %s201
      %s225 = sphi 0, %s227
      %s228 = sphi 0, %s225
      %s229 = sphi 0, %s228
      %s245 = sphi 0, %s229
    $region4: #{ensemble_forward.1} parent=1 // loop_header_branch
      %22 = sbr.rel (%p20) target = $region8
    $region5: #{ensemble_forward.1} parent=1 // loop_body
      %s24 = ssub.s32 %s19, 1
      %s25 = ssub.s32 %s19, 2
      %s32 = sadd.s32 1, %s27
      %p33 = scmp.ge.s32.totalorder %s32, 1
      %s34 = scalar_select %p33, 0, %s32
      %s35 = sadd.s32 1, %s26
      %s36 = scalar_select %p33, %s35, %s26
      %p37 = scmp.ge.s32.totalorder %s36, 4
      %s38 = scalar_select %p37, 0, %s36
      %s39 = ssub.s32 %s27, %s34
      %p40 = scmp.eq.s32.totalorder %s39, 0
      %s42 = sadd.s32 %s41, 1
      %s43 = scalar_select %p40, %s41, %s42
      %p46 = pneg %p40
      %p47 = scmp.eq.s32.totalorder %s19, 3
      %p48 = por %p46, %p47
      %p49 = scmp.ne.s32.totalorder %s41, %s44
      %p50 = scmp.eq.s32.totalorder %s19, 0
      %p51 = por %p49, %p50
      %p52 = scmp.ne.s32.totalorder %s41, %s44
      %p53 = scmp.eq.s32.totalorder %s24, 3
      %p54 = por %p52, %p53
      %p55 = scmp.ne.s32.totalorder %s44, %s45
      %p56 = scmp.eq.s32.totalorder %s24, 0
      %p57 = por %p55, %p56
      %p58 = scmp.ne.s32.totalorder %s44, %s45
      %p59 = scmp.eq.s32.totalorder %s25, 3
      %p60 = por %p58, %p59
      %p62 = scmp.ne.s32.totalorder %s45, %s61
      %p63 = scmp.eq.s32.totalorder %s25, 0
      %p64 = por %p62, %p63
      %s65 = ssub.s32 %s26, %s38
      %p66 = scmp.eq.s32.totalorder %s65, 0
      %s68 = sadd.s32 %s67, 1
      %s69 = scalar_select %p66, %s67, %s68
      %p72 = pneg %p66
      %p73 = scmp.eq.s32.totalorder %s19, 3
      %p74 = por %p72, %p73
      %p75 = scmp.ne.s32.totalorder %s67, %s70
      %p76 = scmp.eq.s32.totalorder %s19, 0
      %p77 = por %p75, %p76
      %p78 = scmp.ne.s32.totalorder %s67, %s70
      %p79 = scmp.eq.s32.totalorder %s24, 3
      %p80 = por %p78, %p79
      %p81 = scmp.ne.s32.totalorder %s70, %s71
      %p82 = scmp.eq.s32.totalorder %s24, 0
      %p83 = por %p81, %p82
      %p84 = scmp.ne.s32.totalorder %s70, %s71
      %p85 = scmp.eq.s32.totalorder %s25, 3
      %p86 = por %p84, %p85
      %p88 = scmp.ne.s32.totalorder %s71, %s87
      %p89 = scmp.eq.s32.totalorder %s25, 0
      %p90 = por %p88, %p89
      %s91 = ssub.s32 %s26, %s38
      %p92 = scmp.eq.s32.totalorder %s91, 0
      %s94 = sadd.s32 %s93, 1
      %s95 = scalar_select %p92, %s93, %s94
      %p98 = pneg %p92
      %p99 = scmp.eq.s32.totalorder %s19, 3
      %p100 = por %p98, %p99
      %p101 = scmp.ne.s32.totalorder %s93, %s96
      %p102 = scmp.eq.s32.totalorder %s19, 0
      %p103 = por %p101, %p102
      %p104 = scmp.ne.s32.totalorder %s93, %s96
      %p105 = scmp.eq.s32.totalorder %s24, 3
      %p106 = por %p104, %p105
      %p107 = scmp.ne.s32.totalorder %s96, %s97
      %p108 = scmp.eq.s32.totalorder %s24, 0
      %p109 = por %p107, %p108
      %p110 = scmp.ne.s32.totalorder %s96, %s97
      %p111 = scmp.eq.s32.totalorder %s25, 3
      %p112 = por %p110, %p111
      %p114 = scmp.ne.s32.totalorder %s97, %s113
      %p115 = scmp.eq.s32.totalorder %s25, 0
      %p116 = por %p114, %p115
      %s117 = ssub.s32 %s26, %s38
      %p118 = scmp.eq.s32.totalorder %s117, 0
      %s120 = sadd.s32 %s119, 1
      %s121 = scalar_select %p118, %s119, %s120
      %p124 = pneg %p118
      %p125 = scmp.eq.s32.totalorder %s19, 3
      %p126 = por %p124, %p125
      %p127 = scmp.ne.s32.totalorder %s119, %s122
      %p128 = scmp.eq.s32.totalorder %s19, 0
      %p129 = por %p127, %p128
      %p130 = scmp.ne.s32.totalorder %s119, %s122
      %p131 = scmp.eq.s32.totalorder %s24, 3
      %p132 = por %p130, %p131
      %p133 = scmp.ne.s32.totalorder %s122, %s123
      %p134 = scmp.eq.s32.totalorder %s24, 0
      %p135 = por %p133, %p134
      %p136 = scmp.ne.s32.totalorder %s122, %s123
      %p137 = scmp.eq.s32.totalorder %s25, 3
      %p138 = por %p136, %p137
      %p140 = scmp.ne.s32.totalorder %s123, %s139
      %p141 = scmp.eq.s32.totalorder %s25, 0
      %p142 = por %p140, %p141
      %s143 = ssub.s32 %s26, %s38
      %p144 = scmp.eq.s32.totalorder %s143, 0
      %s146 = sadd.s32 %s145, 1
      %s147 = scalar_select %p144, %s145, %s146
      %p150 = pneg %p144
      %p151 = scmp.eq.s32.totalorder %s19, 3
      %p152 = por %p150, %p151
      %p153 = scmp.ne.s32.totalorder %s145, %s148
      %p154 = scmp.eq.s32.totalorder %s19, 0
      %p155 = por %p153, %p154
      %p156 = scmp.ne.s32.totalorder %s145, %s148
      %p157 = scmp.eq.s32.totalorder %s24, 3
      %p158 = por %p156, %p157
      %p159 = scmp.ne.s32.totalorder %s148, %s149
      %p160 = scmp.eq.s32.totalorder %s24, 0
      %p161 = por %p159, %p160
      %p162 = scmp.ne.s32.totalorder %s148, %s149
      %p163 = scmp.eq.s32.totalorder %s25, 3
      %p164 = por %p162, %p163
      %p166 = scmp.ne.s32.totalorder %s149, %s165
      %p167 = scmp.eq.s32.totalorder %s25, 0
      %p168 = por %p166, %p167
      %s169 = ssub.s32 %s26, %s38
      %p170 = scmp.eq.s32.totalorder %s169, 0
      %s172 = sadd.s32 %s171, 1
      %s173 = scalar_select %p170, %s171, %s172
      %p176 = pneg %p170
      %p177 = scmp.eq.s32.totalorder %s19, 3
      %p178 = por %p176, %p177
      %p179 = scmp.ne.s32.totalorder %s171, %s174
      %p180 = scmp.eq.s32.totalorder %s19, 0
      %p181 = por %p179, %p180
      %p182 = scmp.ne.s32.totalorder %s171, %s174
      %p183 = scmp.eq.s32.totalorder %s24, 3
      %p184 = por %p182, %p183
      %p185 = scmp.ne.s32.totalorder %s174, %s175
      %p186 = scmp.eq.s32.totalorder %s24, 0
      %p187 = por %p185, %p186
      %p188 = scmp.ne.s32.totalorder %s174, %s175
      %p189 = scmp.eq.s32.totalorder %s25, 3
      %p190 = por %p188, %p189
      %p192 = scmp.ne.s32.totalorder %s175, %s191
      %p193 = scmp.eq.s32.totalorder %s25, 0
      %p194 = por %p192, %p193
      %s195 = ssub.s32 %s26, %s38
      %p196 = scmp.eq.s32.totalorder %s195, 0
      %s198 = sadd.s32 %s197, 1
      %s199 = scalar_select %p196, %s197, %s198
      %p202 = pneg %p196
      %p203 = scmp.eq.s32.totalorder %s19, 3
      %p204 = por %p202, %p203
      %p205 = scmp.ne.s32.totalorder %s197, %s200
      %p206 = scmp.eq.s32.totalorder %s19, 0
      %p207 = por %p205, %p206
      %p208 = scmp.ne.s32.totalorder %s197, %s200
      %p209 = scmp.eq.s32.totalorder %s24, 3
      %p210 = por %p208, %p209
      %p211 = scmp.ne.s32.totalorder %s200, %s201
      %p212 = scmp.eq.s32.totalorder %s24, 0
      %p213 = por %p211, %p212
      %p214 = scmp.ne.s32.totalorder %s200, %s201
      %p215 = scmp.eq.s32.totalorder %s25, 3
      %p216 = por %p214, %p215
      %p218 = scmp.ne.s32.totalorder %s201, %s217
      %p219 = scmp.eq.s32.totalorder %s25, 0
      %p220 = por %p218, %p219
      %s221 = ssub.s32 %s26, %s38
      %s222 = ssub.s32 %s27, %s34
      %s223 = sor.u32 %s221, %s222
      %p224 = scmp.eq.s32.totalorder %s223, 0
      %s226 = sadd.s32 %s225, 1
      %s227 = scalar_select %p224, %s225, %s226
      %p230 = pneg %p224
      %p231 = scmp.eq.s32.totalorder %s19, 3
      %p232 = por %p230, %p231
      %p233 = scmp.ne.s32.totalorder %s225, %s228
      %p234 = scmp.eq.s32.totalorder %s19, 0
      %p235 = por %p233, %p234
      %p236 = scmp.ne.s32.totalorder %s225, %s228
      %p237 = scmp.eq.s32.totalorder %s24, 3
      %p238 = por %p236, %p237
      %p239 = scmp.ne.s32.totalorder %s228, %s229
      %p240 = scmp.eq.s32.totalorder %s24, 0
      %p241 = por %p239, %p240
      %p242 = scmp.ne.s32.totalorder %s228, %s229
      %p243 = scmp.eq.s32.totalorder %s25, 3
      %p244 = por %p242, %p243
      %p246 = scmp.ne.s32.totalorder %s229, %s245
      %p247 = scmp.eq.s32.totalorder %s25, 0
      %p248 = por %p246, %p247
      %p249 = scmp.le.s32.totalorder 1, %s19
      %p250 = scmp.lt.s32.totalorder %s19, 5
      %p251 = pnand %p249, %p250
      %p252 = pneg %p251
      // Predicated region
      $region9: #{ensemble_forward.1} parent=5 // pred_check
        _
      $region10: #{ensemble_forward.1} parent=5 // pred_check_branch
        %254 = sbr.rel (%p251) target = $region12
      $region11: #{ensemble_forward.1} parent=5 // pred_region
        %s255 = ssub.s32 %s19, 1
        // Predicated region
        $region13: #{ensemble_forward.1} parent=11 // pred_check
          %p256 = pneg %p57
        $region14: #{ensemble_forward.1} parent=11 // pred_check_branch
          %258 = sbr.rel (%p256) target = $region16
        $region15: #{ensemble_forward.1} parent=11 // pred_region
          %p259 = scmp.lt.s32.totalorder %s29, 0
          %s260 = scalar_select %p259, %s29, 0
          %s261 = smul.addr %s260, 8
          %s262 = scalar_lea.vmem %s0, %s261
        $region16: #{ensemble_forward.1} parent=11 // pred_fallthru
          _
      $region12: #{ensemble_forward.1} parent=5 // pred_fallthru
        _
      %p263 = scmp.lt.s32.totalorder %s19, 4
      // Predicated region
      $region17: #{ensemble_forward.1} parent=5 // pred_check
        %p264 = pneg %p263
      $region18: #{ensemble_forward.1} parent=5 // pred_check_branch
        %266 = sbr.rel (%p264) target = $region20
      $region19: #{ensemble_forward.1} parent=5 // pred_region
        // Predicated region
        $region21: #{ensemble_forward.1} parent=19 // pred_check
          %p267 = pneg %p77
        $region22: #{ensemble_forward.1} parent=19 // pred_check_branch
          %269 = sbr.rel (%p267) target = $region24
        $region23: #{ensemble_forward.1} parent=19 // pred_region
          %p270 = scmp.lt.s32.totalorder %s26, 3
          %s271 = scalar_select %p270, %s26, 3
          %s272 = smul.addr %s271, 2
          %s273 = scalar_lea.vmem %s1, %s272
        $region24: #{ensemble_forward.1} parent=19 // pred_fallthru
          _
        // Predicated region
        $region25: #{ensemble_forward.1} parent=19 // pred_check
          %p274 = pneg %p103
        $region26: #{ensemble_forward.1} parent=19 // pred_check_branch
          %276 = sbr.rel (%p274) target = $region28
        $region27: #{ensemble_forward.1} parent=19 // pred_region
          %p277 = scmp.lt.s32.totalorder %s26, 3
          %s278 = scalar_select %p277, %s26, 3
          %s279 = scalar_lea.vmem %s2, %s278
        $region28: #{ensemble_forward.1} parent=19 // pred_fallthru
          _
        // Predicated region
        $region29: #{ensemble_forward.1} parent=19 // pred_check
          %p280 = pneg %p129
        $region30: #{ensemble_forward.1} parent=19 // pred_check_branch
          %282 = sbr.rel (%p280) target = $region32
        $region31: #{ensemble_forward.1} parent=19 // pred_region
          %s283 = sand.u32 %s119, 1
          %s284 = scalar_lea.sflag [#allocation3], %s283
          %s285 = sand.u32 %s119, 1
          %s286 = smul.addr %s285, 128
          %s287 = scalar_lea.vmem [#allocation2], %s286
          %s289 = ssub.s32 2048, 2048
          %290 = vsyncadd %s284, %s289
          %s291 = smul.addr %s26, 16
          %s292 = smul.addr %s291, 128
          %s293 = scalar_lea.hbm %s3, %s292
          %s294 = sshll.u32 %s287, 4
          %s295 = int_to_ptr.vmem [resolvable:$true] %s294
          %300 = dma.hbm_to_vmem [thread:$0]  %s293, 2048, %s295, %s284, 128, 128, 8
        $region32: #{ensemble_forward.1} parent=19 // pred_fallthru
          _
        // Predicated region
        $region33: #{ensemble_forward.1} parent=19 // pred_check
          %p301 = pneg %p155
        $region34: #{ensemble_forward.1} parent=19 // pred_check_branch
          %303 = sbr.rel (%p301) target = $region36
        $region35: #{ensemble_forward.1} parent=19 // pred_region
          %p304 = scmp.lt.s32.totalorder %s26, 3
          %s305 = scalar_select %p304, %s26, 3
          %s306 = scalar_lea.vmem %s4, %s305
        $region36: #{ensemble_forward.1} parent=19 // pred_fallthru
          _
        // Predicated region
        $region37: #{ensemble_forward.1} parent=19 // pred_check
          %p307 = pneg %p181
        $region38: #{ensemble_forward.1} parent=19 // pred_check_branch
          %309 = sbr.rel (%p307) target = $region40
        $region39: #{ensemble_forward.1} parent=19 // pred_region
          %s310 = sand.u32 %s171, 1
          %s311 = scalar_lea.sflag [#allocation5], %s310
          %s312 = sand.u32 %s171, 1
          %s313 = smul.addr %s312, 128
          %s314 = scalar_lea.vmem [#allocation4], %s313
          %s316 = ssub.s32 2048, 2048
          %317 = vsyncadd %s311, %s316
          %s318 = smul.addr %s26, 16
          %s319 = smul.addr %s318, 128
          %s320 = scalar_lea.hbm %s5, %s319
          %s321 = sshll.u32 %s314, 4
          %s322 = int_to_ptr.vmem [resolvable:$true] %s321
          %327 = dma.hbm_to_vmem [thread:$0]  %s320, 2048, %s322, %s311, 128, 128, 8
        $region40: #{ensemble_forward.1} parent=19 // pred_fallthru
          _
        // Predicated region
        $region41: #{ensemble_forward.1} parent=19 // pred_check
          %p328 = pneg %p207
        $region42: #{ensemble_forward.1} parent=19 // pred_check_branch
          %330 = sbr.rel (%p328) target = $region44
        $region43: #{ensemble_forward.1} parent=19 // pred_region
          %p331 = scmp.lt.s32.totalorder %s26, 3
          %s332 = scalar_select %p331, %s26, 3
          %s333 = scalar_lea.vmem %s6, %s332
        $region44: #{ensemble_forward.1} parent=19 // pred_fallthru
          _
      $region20: #{ensemble_forward.1} parent=5 // pred_fallthru
        _
      %p334 = scmp.le.s32.totalorder 1, %s19
      %p335 = scmp.lt.s32.totalorder %s19, 5
      %p336 = pnand %p334, %p335
      %p337 = pneg %p336
      // Predicated region
      $region45: #{ensemble_forward.1} parent=5 // pred_check
        _
      $region46: #{ensemble_forward.1} parent=5 // pred_check_branch
        %339 = sbr.rel (%p336) target = $region48
      $region47: #{ensemble_forward.1} parent=5 // pred_region
        %s340 = ssub.s32 %s19, 1
        %s341 = sand.u32 %s122, 1
        %s342 = scalar_lea.sflag [#allocation3], %s341
        %s343 = sand.u32 %s122, 1
        %s344 = smul.addr %s343, 128
        %s345 = scalar_lea.vmem [#allocation2], %s344
        // Predicated region
        $region49: #{ensemble_forward.1} parent=47 // pred_check
          %p346 = pneg %p135
        $region50: #{ensemble_forward.1} parent=47 // pred_check_branch
          %348 = sbr.rel (%p346) target = $region52
        $region51: #{ensemble_forward.1} parent=47 // pred_region
          %349 = dma.done %s342, 2048
        $region52: #{ensemble_forward.1} parent=47 // pred_fallthru
          _
        %s350 = sand.u32 %s174, 1
        %s351 = scalar_lea.sflag [#allocation5], %s350
        %s352 = sand.u32 %s174, 1
        %s353 = smul.addr %s352, 128
        %s354 = scalar_lea.vmem [#allocation4], %s353
        // Predicated region
        $region53: #{ensemble_forward.1} parent=47 // pred_check
          %p355 = pneg %p187
        $region54: #{ensemble_forward.1} parent=47 // pred_check_branch
          %357 = sbr.rel (%p355) target = $region56
        $region55: #{ensemble_forward.1} parent=47 // pred_region
          %358 = dma.done %s351, 2048
        $region56: #{ensemble_forward.1} parent=47 // pred_fallthru
          _
        %p359 = scmp.lt.s32.totalorder %s29, 0
        %s360 = scalar_select %p359, %s29, 0
        %s361 = smul.addr %s360, 8
        %s362 = scalar_lea.vmem %s0, %s361
        %p363 = pneg %p57
        %p364 = pneg %p54
        %p365 = scmp.lt.s32.totalorder %s28, 3
        %s366 = scalar_select %p365, %s28, 3
        %s367 = smul.addr %s366, 2
        %s368 = scalar_lea.vmem %s1, %s367
        %p369 = pneg %p83
        %p370 = pneg %p80
        %p371 = scmp.lt.s32.totalorder %s28, 3
        %s372 = scalar_select %p371, %s28, 3
        %s373 = scalar_lea.vmem %s2, %s372
        %p374 = pneg %p109
        %p375 = pneg %p106
        %s376 = sand.u32 %s122, 1
        %s377 = scalar_lea.sflag [#allocation3], %s376
        %s378 = sand.u32 %s122, 1
        %s379 = smul.addr %s378, 128
        %s380 = scalar_lea.vmem [#allocation2], %s379
        %p381 = pneg %p135
        %p382 = pneg %p132
        %p383 = scmp.lt.s32.totalorder %s28, 3
        %s384 = scalar_select %p383, %s28, 3
        %s385 = scalar_lea.vmem %s4, %s384
        %p386 = pneg %p161
        %p387 = pneg %p158
        %s388 = sand.u32 %s174, 1
        %s389 = scalar_lea.sflag [#allocation5], %s388
        %s390 = sand.u32 %s174, 1
        %s391 = smul.addr %s390, 128
        %s392 = scalar_lea.vmem [#allocation4], %s391
        %p393 = pneg %p187
        %p394 = pneg %p184
        %p395 = scmp.lt.s32.totalorder %s28, 3
        %s396 = scalar_select %p395, %s28, 3
        %s397 = scalar_lea.vmem %s6, %s396
        %p398 = pneg %p213
        %p399 = pneg %p210
        %p400 = pneg %p241
        %p401 = pneg %p238
        %p402 = scmp.lt.s32.totalorder %s28, 3
        %s403 = scalar_select %p402, %s28, 3
        %p404 = scmp.lt.s32.totalorder %s29, 0
        %s405 = scalar_select %p404, %s29, 0
        %s406 = sadd.s32 %s405, %s403
        %s407 = smul.addr %s406, 8
        %s408 = scalar_lea.vmem %s7, %s407
        %p409 = scmp.lt.s32.totalorder %s29, 0
        %s410 = scalar_select %p409, %s29, 0
        %s411 = smul.addr %s410, 8
        %s412 = scalar_lea.vmem %s0, %s411
        %p413 = scmp.lt.s32.totalorder %s28, 3
        %s414 = scalar_select %p413, %s28, 3
        %s415 = smul.addr %s414, 2
        %s416 = scalar_lea.vmem %s1, %s415
        %p417 = scmp.lt.s32.totalorder %s28, 3
        %s418 = scalar_select %p417, %s28, 3
        %s419 = scalar_lea.vmem %s2, %s418
        %p420 = scmp.lt.s32.totalorder %s28, 3
        %s421 = scalar_select %p420, %s28, 3
        %s422 = scalar_lea.vmem %s4, %s421
        %p423 = scmp.lt.s32.totalorder %s28, 3
        %s424 = scalar_select %p423, %s28, 3
        %s425 = scalar_lea.vmem %s6, %s424
        %p426 = scmp.lt.s32.totalorder %s28, 3
        %s427 = scalar_select %p426, %s28, 3
        %p428 = scmp.lt.s32.totalorder %s29, 0
        %s429 = scalar_select %p428, %s29, 0
        %s430 = sadd.s32 %s429, %s427
        %s431 = smul.addr %s430, 8
        %s432 = scalar_lea.vmem %s7, %s431
        %v433 = vld [vmem:[%s412] sm:$0xff]
        %v434 = vld [vmem:[%s416] sm:$0x3]
        %436 = vset.pattern.permute.xlu0 0
        %437 = vperm.xlu0 %436, %v433
        %v438 = vpop.permute.xlu0 %437
        %v440 = vlaneseq
        %v441 = vshrl.u32 %v440, 7
        %v442 = vsub.s32 0, %v441
        %v443 = vrot.slane %v434, %v442
        %v444 = vmul.f32 %v438, %v443
        %445 = vset.pattern.permute.xlu0 1
        %446 = vperm.xlu0 %445, %v433
        %v447 = vpop.permute.xlu0 %446
        %v449 = vlaneseq
        %v450 = vshrl.u32 %v449, 7
        %v451 = vsub.s32 1, %v450
        %v452 = vrot.slane %v434, %v451
        %v453 = vmul.f32 %v447, %v452
        %v454 = vadd.f32 %v444, %v453
        %v455 = vld [vmem:[%s419] sm:$0x1]
        %v457 = vlaneseq
        %v458 = vshrl.u32 %v457, 7
        %v459 = vsub.s32 0, %v458
        %v460 = vrot.slane %v455, %v459
        %v462 = vadd.f32 %v454, %v460
        %v463 = vmax.f32 %v462, 0.0
        %v464 = vld [vmem:[%s345] sm:$0xff]
        %v465 = vld [vmem:[%s345 + $0x8] sm:$0xff]
        %v466 = vld [vmem:[%s345 + $0x10] sm:$0xff]
        %v467 = vld [vmem:[%s345 + $0x18] sm:$0xff]
        %v468 = vld [vmem:[%s345 + $0x20] sm:$0xff]
        %v469 = vld [vmem:[%s345 + $0x28] sm:$0xff]
        %v470 = vld [vmem:[%s345 + $0x30] sm:$0xff]
        %v471 = vld [vmem:[%s345 + $0x38] sm:$0xff]
        %v472 = vld [vmem:[%s345 + $0x40] sm:$0xff]
        %v473 = vld [vmem:[%s345 + $0x48] sm:$0xff]
        %v474 = vld [vmem:[%s345 + $0x50] sm:$0xff]
        %v475 = vld [vmem:[%s345 + $0x58] sm:$0xff]
        %v476 = vld [vmem:[%s345 + $0x60] sm:$0xff]
        %v477 = vld [vmem:[%s345 + $0x68] sm:$0xff]
        %v478 = vld [vmem:[%s345 + $0x70] sm:$0xff]
        %v479 = vld [vmem:[%s345 + $0x78] sm:$0xff]
        %v480 = vld [vmem:[%s422] sm:$0x1]
        %v482 = vlaneseq
        %v483 = vshrl.u32 %v482, 7
        %v484 = vsub.s32 0, %v483
        %v485 = vrot.slane %v480, %v484
        %487 = vmatprep.subr.mxu0 0.0
        %488 = vmatpush1.msra.mxu0 %v464
        %489 = vmatprep.subr.mxu0 0.0
        %490 = vmatpush1.msra.mxu0 %v465
        %491 = vmatprep.subr.mxu0 0.0
        %492 = vmatpush1.msra.mxu0 %v466
        %493 = vmatprep.subr.mxu0 0.0
        %494 = vmatpush1.msra.mxu0 %v467
        %495 = vmatprep.subr.mxu0 0.0
        %496 = vmatpush1.msra.mxu0 %v468
        %497 = vmatprep.subr.mxu0 0.0
        %498 = vmatpush1.msra.mxu0 %v469
        %499 = vmatprep.subr.mxu0 0.0
        %500 = vmatpush1.msra.mxu0 %v470
        %501 = vmatprep.subr.mxu0 0.0
        %502 = vmatpush1.msra.mxu0 %v471
        %503 = vmatprep.subr.mxu0 0.0
        %504 = vmatpush1.msra.mxu0 %v472
        %505 = vmatprep.subr.mxu0 0.0
        %506 = vmatpush1.msra.mxu0 %v473
        %507 = vmatprep.subr.mxu0 0.0
        %508 = vmatpush1.msra.mxu0 %v474
        %509 = vmatprep.subr.mxu0 0.0
        %510 = vmatpush1.msra.mxu0 %v475
        %511 = vmatprep.subr.mxu0 0.0
        %512 = vmatpush1.msra.mxu0 %v476
        %513 = vmatprep.subr.mxu0 0.0
        %514 = vmatpush1.msra.mxu0 %v477
        %515 = vmatprep.subr.mxu0 0.0
        %516 = vmatpush1.msra.mxu0 %v478
        %517 = vmatprep.subr.mxu0 0.0
        %518 = vmatpush1.msra.mxu0 %v479
        %519 = vmatprep.subr.mxu0 0.0
        %520 = vmatpush1.msra.mxu0 0.0
        %521 = vmatprep.subr.mxu0 0.0
        %522 = vmatpush1.msra.mxu0 0.0
        %523 = vmatprep.subr.mxu0 0.0
        %524 = vmatpush1.msra.mxu0 0.0
        %525 = vmatprep.subr.mxu0 0.0
        %526 = vmatpush1.msra.mxu0 0.0
        %527 = vmatprep.subr.mxu0 0.0
        %528 = vmatpush1.msra.mxu0 0.0
        %529 = vmatprep.subr.mxu0 0.0
        %530 = vmatpush1.msra.mxu0 0.0
        %531 = vmatprep.subr.mxu0 0.0
        %532 = vmatpush1.msra.mxu0 0.0
        %533 = vmatprep.subr.mxu0 0.0
        %534 = vmatpush1.msra.mxu0 0.0
        %535 = vmatprep.subr.mxu0 0.0
        %536 = vmatpush1.msra.mxu0 0.0
        %537 = vmatprep.subr.mxu0 0.0
        %538 = vmatpush1.msra.mxu0 0.0
        %539 = vmatprep.subr.mxu0 0.0
        %540 = vmatpush1.msra.mxu0 0.0
        %541 = vmatprep.subr.mxu0 0.0
        %542 = vmatpush1.msra.mxu0 0.0
        %543 = vmatprep.subr.mxu0 0.0
        %544 = vmatpush1.msra.mxu0 0.0
        %545 = vmatprep.subr.mxu0 0.0
        %546 = vmatpush1.msra.mxu0 0.0
        %547 = vmatprep.subr.mxu0 0.0
        %548 = vmatpush1.msra.mxu0 0.0
        %549 = vmatprep.subr.mxu0 0.0
        %550 = vmatpush1.msra.mxu0 0.0
        %551 = vmatprep.mubr.f32.mxu0 0.0
        %552 = vmatmul.mubr.f32.gmra.mrb[0].mxu0 %v463
        %v553 = vpop.f32.mrb[0].mxu0
        %v554 = vadd.f32 %v485, %v553
        %v555 = vpop.f32.mrb[0].mxu0
        %556 = vdwg.mxu0
        %v557 = vmax.f32 %v554, 0.0
        %v558 = vld [vmem:[%s354] sm:$0xff]
        %v559 = vld [vmem:[%s354 + $0x8] sm:$0xff]
        %v560 = vld [vmem:[%s354 + $0x10] sm:$0xff]
        %v561 = vld [vmem:[%s354 + $0x18] sm:$0xff]
        %v562 = vld [vmem:[%s354 + $0x20] sm:$0xff]
        %v563 = vld [vmem:[%s354 + $0x28] sm:$0xff]
        %v564 = vld [vmem:[%s354 + $0x30] sm:$0xff]
        %v565 = vld [vmem:[%s354 + $0x38] sm:$0xff]
        %v566 = vld [vmem:[%s354 + $0x40] sm:$0xff]
        %v567 = vld [vmem:[%s354 + $0x48] sm:$0xff]
        %v568 = vld [vmem:[%s354 + $0x50] sm:$0xff]
        %v569 = vld [vmem:[%s354 + $0x58] sm:$0xff]
        %v570 = vld [vmem:[%s354 + $0x60] sm:$0xff]
        %v571 = vld [vmem:[%s354 + $0x68] sm:$0xff]
        %v572 = vld [vmem:[%s354 + $0x70] sm:$0xff]
        %v573 = vld [vmem:[%s354 + $0x78] sm:$0xff]
        %574 = vmatprep.subr.mxu0 0.0
        %575 = vmatpush1.msra.mxu0 %v558
        %576 = vmatprep.subr.mxu0 0.0
        %577 = vmatpush1.msra.mxu0 %v559
        %578 = vmatprep.subr.mxu0 0.0
        %579 = vmatpush1.msra.mxu0 %v560
        %580 = vmatprep.subr.mxu0 0.0
        %581 = vmatpush1.msra.mxu0 %v561
        %582 = vmatprep.subr.mxu0 0.0
        %583 = vmatpush1.msra.mxu0 %v562
        %584 = vmatprep.subr.mxu0 0.0
        %585 = vmatpush1.msra.mxu0 %v563
        %586 = vmatprep.subr.mxu0 0.0
        %587 = vmatpush1.msra.mxu0 %v564
        %588 = vmatprep.subr.mxu0 0.0
        %589 = vmatpush1.msra.mxu0 %v565
        %590 = vmatprep.subr.mxu0 0.0
        %591 = vmatpush1.msra.mxu0 %v566
        %592 = vmatprep.subr.mxu0 0.0
        %593 = vmatpush1.msra.mxu0 %v567
        %594 = vmatprep.subr.mxu0 0.0
        %595 = vmatpush1.msra.mxu0 %v568
        %596 = vmatprep.subr.mxu0 0.0
        %597 = vmatpush1.msra.mxu0 %v569
        %598 = vmatprep.subr.mxu0 0.0
        %599 = vmatpush1.msra.mxu0 %v570
        %600 = vmatprep.subr.mxu0 0.0
        %601 = vmatpush1.msra.mxu0 %v571
        %602 = vmatprep.subr.mxu0 0.0
        %603 = vmatpush1.msra.mxu0 %v572
        %604 = vmatprep.subr.mxu0 0.0
        %605 = vmatpush1.msra.mxu0 %v573
        %606 = vmatprep.subr.mxu0 0.0
        %607 = vmatpush1.msra.mxu0 0.0
        %608 = vmatprep.subr.mxu0 0.0
        %609 = vmatpush1.msra.mxu0 0.0
        %610 = vmatprep.subr.mxu0 0.0
        %611 = vmatpush1.msra.mxu0 0.0
        %612 = vmatprep.subr.mxu0 0.0
        %613 = vmatpush1.msra.mxu0 0.0
        %614 = vmatprep.subr.mxu0 0.0
        %615 = vmatpush1.msra.mxu0 0.0
        %616 = vmatprep.subr.mxu0 0.0
        %617 = vmatpush1.msra.mxu0 0.0
        %618 = vmatprep.subr.mxu0 0.0
        %619 = vmatpush1.msra.mxu0 0.0
        %620 = vmatprep.subr.mxu0 0.0
        %621 = vmatpush1.msra.mxu0 0.0
        %622 = vmatprep.subr.mxu0 0.0
        %623 = vmatpush1.msra.mxu0 0.0
        %624 = vmatprep.subr.mxu0 0.0
        %625 = vmatpush1.msra.mxu0 0.0
        %626 = vmatprep.subr.mxu0 0.0
        %627 = vmatpush1.msra.mxu0 0.0
        %628 = vmatprep.subr.mxu0 0.0
        %629 = vmatpush1.msra.mxu0 0.0
        %630 = vmatprep.subr.mxu0 0.0
        %631 = vmatpush1.msra.mxu0 0.0
        %632 = vmatprep.subr.mxu0 0.0
        %633 = vmatpush1.msra.mxu0 0.0
        %634 = vmatprep.subr.mxu0 0.0
        %635 = vmatpush1.msra.mxu0 0.0
        %636 = vmatprep.subr.mxu0 0.0
        %637 = vmatpush1.msra.mxu0 0.0
        %638 = vmatprep.mubr.f32.mxu0 0.0
        %639 = vmatmul.mubr.f32.gmra.mrb[0].mxu0 %v557
        %v640 = vpop.f32.mrb[0].mxu0
        %v641 = vadd.f32 0.0, %v640
        %v642 = vpop.f32.mrb[0].mxu0
        %643 = vdwg.mxu0
        %v644 = vld [vmem:[%s425] sm:$0x1]
        %v646 = vlaneseq
        %v647 = vshrl.u32 %v646, 7
        %v648 = vsub.s32 0, %v647
        %v649 = vrot.slane %v644, %v648
        %v651 = vadd.f32 %v641, %v649
        %vm652 = vcmask 15360
        %653 = vst.msk [vmem:[%s432] sm:$0xff] %vm652, %v651
        %p654 = scmp.lt.s32.totalorder %s28, 3
        %s655 = scalar_select %p654, %s28, 3
        %p656 = scmp.lt.s32.totalorder %s29, 0
        %s657 = scalar_select %p656, %s29, 0
        %s658 = sadd.s32 %s657, %s655
        %s659 = smul.addr %s658, 8
        %s660 = scalar_lea.vmem %s7, %s659
        // Predicated region
        $region57: #{ensemble_forward.1} parent=47 // pred_check
          %p661 = pneg %p238
        $region58: #{ensemble_forward.1} parent=47 // pred_check_branch
          %663 = sbr.rel (%p661) target = $region60
        $region59: #{ensemble_forward.1} parent=47 // pred_region
          _
        $region60: #{ensemble_forward.1} parent=47 // pred_fallthru
          _
      $region48: #{ensemble_forward.1} parent=5 // pred_fallthru
        _
      %p664 = scmp.le.s32.totalorder 2, %s19
      // Predicated region
      $region61: #{ensemble_forward.1} parent=5 // pred_check
        %p665 = pneg %p664
      $region62: #{ensemble_forward.1} parent=5 // pred_check_branch
        %667 = sbr.rel (%p665) target = $region64
      $region63: #{ensemble_forward.1} parent=5 // pred_region
        %s668 = ssub.s32 %s19, 2
        // Predicated region
        $region65: #{ensemble_forward.1} parent=63 // pred_check
          %p669 = pneg %p244
        $region66: #{ensemble_forward.1} parent=63 // pred_check_branch
          %671 = sbr.rel (%p669) target = $region68
        $region67: #{ensemble_forward.1} parent=63 // pred_region
          %p672 = scmp.lt.s32.totalorder %s30, 3
          %s673 = scalar_select %p672, %s30, 3
          %p674 = scmp.lt.s32.totalorder %s31, 0
          %s675 = scalar_select %p674, %s31, 0
          %s676 = sadd.s32 %s675, %s673
          %s677 = smul.addr %s676, 8
          %s678 = scalar_lea.vmem %s7, %s677
        $region68: #{ensemble_forward.1} parent=63 // pred_fallthru
          _
      $region64: #{ensemble_forward.1} parent=5 // pred_fallthru
        _
    $region6: #{ensemble_forward.1} parent=1 // loop_footer
      %s23 = sadd.s32 1, %s19
    $region7: #{ensemble_forward.1} parent=1 // loop_footer_branch
      %18 = sbr.rel target = $region3
    $region8: #{ensemble_forward.1} parent=1 // loop_exit
      _
    %679 = vsyncpa [#allocation3], 1
    %s680 = scalar_lea.sflag [#allocation3], 1
    %681 = vsyncpa %s680, 1
    %682 = vsyncpa [#allocation5], 1
    %s683 = scalar_lea.sflag [#allocation5], 1
    %684 = vsyncpa %s683, 1

</llo_original>
